<compile_context>
chip_gen: v7x
topology: tpu7x:2x2x1
jax: 0.10.0
libtpu: 0.0.40
codegen_flags: <defaults>
</compile_context>

<pallas_src>
import jax
import jax.numpy as jnp
from jax.experimental import pallas as pl
from jax.experimental.pallas import tpu as pltpu

_SUB = 16     # sublane multiple (safe for bf16 packing)
_LANE = 128   # lane multiple


def _round_up(n, m):
    return ((n + m - 1) // m) * m


def generator_kernel(x_ref, w1_ref, b1_ref, w2_ref, b2_ref, o_ref):
    # Hidden layer: (TB, L)bf16 @ (L, H)bf16 -> f32 accum; bias + ReLU in f32.
    h = jnp.dot(x_ref[...], w1_ref[...], preferred_element_type=jnp.float32)
    h = jnp.maximum(h + b1_ref[...], 0.0)
    # Output layer: recast activations to bf16 for the MXU, accumulate in f32.
    y = jnp.dot(h.astype(jnp.bfloat16), w2_ref[...],
                preferred_element_type=jnp.float32)
    y = y + b2_ref[...]
    # Numerically stable sigmoid: 0.5 * tanh(0.5*y) + 0.5.
    # One EUP push per element; the mul/add land on the (slack) VPU.
    o_ref[...] = (0.5 * jnp.tanh(0.5 * y) + 0.5).astype(o_ref.dtype)


def prepare_params(w1, b1, w2, b2):
    """One-time weight prep, hoisted out of the per-step forward.

    Casts weights to bf16 (halves the resident-weight DMA), lane-pads
    w2 / b2 to a multiple of 128 so output stores are unmasked, and
    reshapes biases to (1, N) f32 rows.
    """
    H = w1.shape[1]
    O = w2.shape[1]
    O_pad = _round_up(O, _LANE)
    if O_pad != O:
        w2 = jnp.pad(w2, ((0, 0), (0, O_pad - O)))
        b2 = jnp.pad(b2, (0, O_pad - O))
    return (w1.astype(jnp.bfloat16),
            b1.reshape(1, H).astype(jnp.float32),
            w2.astype(jnp.bfloat16),
            b2.reshape(1, O_pad).astype(jnp.float32),
            O)  # original output width (for optional unpad)


def generator_forward(x, prepared, *, tile_b=512, out_dtype=jnp.bfloat16,
                      unpad=True):
    w1, b1, w2, b2, O = prepared
    B, L = x.shape
    H = w1.shape[1]
    O_pad = w2.shape[1]

    # Batch tiling: tile is a multiple of the sublane quantum.
    B_min = _round_up(B, _SUB)
    tb = min(tile_b, B_min)
    # v7x: when the batch is large enough, keep grid >= 2 so the "parallel"
    # batch axis can actually shard across both TensorCores.
    if B_min >= 256 and B_min // tb < 2:
        tb = _round_up(B_min // 2, _SUB)
    B_pad = _round_up(B_min, tb)
    if B_pad != B:
        x = jnp.pad(x, ((0, B_pad - B), (0, 0)))
    x_bf = x.astype(jnp.bfloat16)

    out = pl.pallas_call(
        generator_kernel,
        out_shape=jax.ShapeDtypeStruct((B_pad, O_pad), out_dtype),
        grid=(B_pad // tb,),
        in_specs=[
            pl.BlockSpec((tb, L), lambda i: (i, 0)),      # x: streamed per batch tile
            pl.BlockSpec((L, H), lambda i: (0, 0)),       # w1: VMEM-resident
            pl.BlockSpec((1, H), lambda i: (0, 0)),       # b1: VMEM-resident
            pl.BlockSpec((H, O_pad), lambda i: (0, 0)),   # w2: VMEM-resident
            pl.BlockSpec((1, O_pad), lambda i: (0, 0)),   # b2: VMEM-resident
        ],
        out_specs=pl.BlockSpec((tb, O_pad), lambda i: (i, 0)),
        compiler_params=pltpu.CompilerParams(
            dimension_semantics=("parallel",)),
    )(x_bf, w1, b1, w2, b2)

    if unpad:
        # Semantics-preserving (B, output_size) result. Throughput-critical
        # callers can pass unpad=False and consume the lane-padded buffer
        # directly, skipping this extra HBM pass.
        return out[:B, :O]
    return out


if __name__ == "__main__":
    latent_size = 16
    hidden_size = 128
    output_size = 28 * 28  # 784
    batch = 8

    key = jax.random.PRNGKey(0)
    k1, k2, k3, k4, kx = jax.random.split(key, 5)
    # Deterministic init mimicking PyTorch nn.Linear (uniform +-1/sqrt(fan_in)).
    bound1 = 1.0 / (latent_size ** 0.5)
    bound2 = 1.0 / (hidden_size ** 0.5)
    w1 = jax.random.uniform(k1, (latent_size, hidden_size), jnp.float32, -bound1, bound1)
    b1 = jax.random.uniform(k2, (hidden_size,), jnp.float32, -bound1, bound1)
    w2 = jax.random.uniform(k3, (hidden_size, output_size), jnp.float32, -bound2, bound2)
    b2 = jax.random.uniform(k4, (output_size,), jnp.float32, -bound2, bound2)
    x = jax.random.normal(kx, (batch, latent_size), jnp.float32)

    prepared = prepare_params(w1, b1, w2, b2)   # hoisted one-time weight prep
    out = generator_forward(x, prepared)
    out = jax.block_until_ready(out)

    # Reference in plain JAX with the same bf16 rounding the kernel applies
    # to x, w1, w2 and the hidden activation (biases stay f32, math in f32).
    xr = x.astype(jnp.bfloat16).astype(jnp.float32)
    w1r = w1.astype(jnp.bfloat16).astype(jnp.float32)
    w2r = w2.astype(jnp.bfloat16).astype(jnp.float32)
    h = jnp.maximum(xr @ w1r + b1, 0.0)
    h = h.astype(jnp.bfloat16).astype(jnp.float32)
    ref = jax.nn.sigmoid(h @ w2r + b2)

    assert out.shape == (batch, output_size), out.shape
    err = float(jnp.max(jnp.abs(out.astype(jnp.float32) - ref)))
    assert err < 2e-2, err

    print("KERNEL_OK")
</pallas_src>

<mosaic_0001>
module attributes {stable_mosaic.version = 11 : i64} {
  func.func @generator_kernel(%arg0: i32, %arg1: memref<16x16xbf16, #tpu.memory_space<vmem>>, %arg2: memref<16x128xbf16, #tpu.memory_space<vmem>>, %arg3: memref<1x128xf32, #tpu.memory_space<vmem>>, %arg4: memref<128x896xbf16, #tpu.memory_space<vmem>>, %arg5: memref<1x896xf32, #tpu.memory_space<vmem>>, %arg6: memref<16x896xbf16, #tpu.memory_space<vmem>>) attributes {dimension_semantics = [#tpu.dimension_semantics<parallel>], iteration_bounds = array<i64: 1>, scalar_prefetch = 0 : i64, scratch_operands = 0 : i64, tpu.core_type = #tpu.core_type<tc>, window_params = [{transform_indices = @transform_0, window_bounds = array<i64: 16, 16>}, {pipeline_mode = #tpu.pipeline_mode<synchronous>, transform_indices = @transform_1, window_bounds = array<i64: 16, 128>}, {pipeline_mode = #tpu.pipeline_mode<synchronous>, transform_indices = @transform_2, window_bounds = array<i64: 1, 128>}, {pipeline_mode = #tpu.pipeline_mode<synchronous>, transform_indices = @transform_3, window_bounds = array<i64: 128, 896>}, {pipeline_mode = #tpu.pipeline_mode<synchronous>, transform_indices = @transform_4, window_bounds = array<i64: 1, 896>}, {transform_indices = @transform_5, window_bounds = array<i64: 16, 896>}]} {
    %c0 = arith.constant 0 : index
    %c0_0 = arith.constant 0 : index
    %0 = vector.load %arg1[%c0, %c0_0] : memref<16x16xbf16, #tpu.memory_space<vmem>>, vector<16x16xbf16>
    %c0_1 = arith.constant 0 : index
    %c0_2 = arith.constant 0 : index
    %1 = vector.load %arg2[%c0_1, %c0_2] : memref<16x128xbf16, #tpu.memory_space<vmem>>, vector<16x128xbf16>
    %cst = arith.constant dense<0.000000e+00> : vector<16x128xf32>
    %2 = tpu.matmul %0, %1, %cst {dimension_numbers = #tpu.dot_dimension_numbers<[1], [0], [0], [1], [0, 0, 1, 1], [], []>} : vector<16x16xbf16>, vector<16x128xbf16>, vector<16x128xf32> -> vector<16x128xf32>
    %c0_3 = arith.constant 0 : index
    %c0_4 = arith.constant 0 : index
    %3 = vector.load %arg3[%c0_3, %c0_4] : memref<1x128xf32, #tpu.memory_space<vmem>>, vector<1x128xf32>
    %4 = vector.broadcast %3 : vector<1x128xf32> to vector<16x128xf32>
    %5 = arith.addf %2, %4 : vector<16x128xf32>
    %cst_5 = arith.constant 0.000000e+00 : f32
    %6 = vector.broadcast %cst_5 : f32 to vector<16x128xf32>
    %7 = arith.maximumf %5, %6 : vector<16x128xf32>
    %8 = arith.truncf %7 : vector<16x128xf32> to vector<16x128xbf16>
    %c0_6 = arith.constant 0 : index
    %c0_7 = arith.constant 0 : index
    %9 = vector.load %arg4[%c0_6, %c0_7] : memref<128x896xbf16, #tpu.memory_space<vmem>>, vector<128x896xbf16>
    %cst_8 = arith.constant dense<0.000000e+00> : vector<16x896xf32>
    %10 = tpu.matmul %8, %9, %cst_8 {dimension_numbers = #tpu.dot_dimension_numbers<[1], [0], [0], [1], [0, 0, 1, 1], [], []>} : vector<16x128xbf16>, vector<128x896xbf16>, vector<16x896xf32> -> vector<16x896xf32>
    %c0_9 = arith.constant 0 : index
    %c0_10 = arith.constant 0 : index
    %11 = vector.load %arg5[%c0_9, %c0_10] : memref<1x896xf32, #tpu.memory_space<vmem>>, vector<1x896xf32>
    %12 = vector.broadcast %11 : vector<1x896xf32> to vector<16x896xf32>
    %13 = arith.addf %10, %12 : vector<16x896xf32>
    %cst_11 = arith.constant 5.000000e-01 : f32
    %14 = vector.broadcast %cst_11 : f32 to vector<16x896xf32>
    %15 = arith.mulf %14, %13 : vector<16x896xf32>
    %16 = math.tanh %15 : vector<16x896xf32>
    %cst_12 = arith.constant 5.000000e-01 : f32
    %17 = vector.broadcast %cst_12 : f32 to vector<16x896xf32>
    %18 = arith.mulf %17, %16 : vector<16x896xf32>
    %cst_13 = arith.constant 5.000000e-01 : f32
    %19 = vector.broadcast %cst_13 : f32 to vector<16x896xf32>
    %20 = arith.addf %18, %19 : vector<16x896xf32>
    %21 = arith.truncf %20 : vector<16x896xf32> to vector<16x896xbf16>
    %c0_14 = arith.constant 0 : index
    %c0_15 = arith.constant 0 : index
    %22 = vector.load %arg6[%c0_14, %c0_15] : memref<16x896xbf16, #tpu.memory_space<vmem>>, vector<16x896xbf16>
    tpu.vector_store %arg6[%c0_14, %c0_15], %21 {strides = array<i32>} : memref<16x896xbf16, #tpu.memory_space<vmem>>, vector<16x896xbf16>,
    return
  }
  func.func @transform_0(%arg0: i32) -> (i32, i32) {
    %c0_i32 = arith.constant 0 : i32
    %c0_i32_0 = arith.constant 0 : i32
    return %arg0, %c0_i32 : i32, i32
  }
  func.func @transform_1(%arg0: i32) -> (i32, i32) {
    %c0_i32 = arith.constant 0 : i32
    %c0_i32_0 = arith.constant 0 : i32
    %c0_i32_1 = arith.constant 0 : i32
    return %c0_i32, %c0_i32_0 : i32, i32
  }
  func.func @transform_2(%arg0: i32) -> (i32, i32) {
    %c0_i32 = arith.constant 0 : i32
    %c0_i32_0 = arith.constant 0 : i32
    %c0_i32_1 = arith.constant 0 : i32
    return %c0_i32, %c0_i32_0 : i32, i32
  }
  func.func @transform_3(%arg0: i32) -> (i32, i32) {
    %c0_i32 = arith.constant 0 : i32
    %c0_i32_0 = arith.constant 0 : i32
    %c0_i32_1 = arith.constant 0 : i32
    return %c0_i32, %c0_i32_0 : i32, i32
  }
  func.func @transform_4(%arg0: i32) -> (i32, i32) {
    %c0_i32 = arith.constant 0 : i32
    %c0_i32_0 = arith.constant 0 : i32
    %c0_i32_1 = arith.constant 0 : i32
    return %c0_i32, %c0_i32_0 : i32, i32
  }
  func.func @transform_5(%arg0: i32) -> (i32, i32) {
    %c0_i32 = arith.constant 0 : i32
    %c0_i32_0 = arith.constant 0 : i32
    return %arg0, %c0_i32 : i32, i32
  }
}

</mosaic_0001>

<llo_original>
// kernel: tpu_custom_call.1
$region0: #{tpu_custom_call.1}
  #allocation0 [shape = 'u32[]', space=smem, size = 0x4, offset = 0x4, fixed_abs, tag = 'smem constant byte address 0x4 - core index']
  #allocation1 [shape = 'u32[144,128]{1,0:T(1,128)}', space=vmem, size = 0x12000, scoped, tag = 'internal scratch']
  %s0 = inlined_call_operand.hbm [shape: bf16[16,16], index: 0, kind: input, shape index: {}]
  %s1 = inlined_call_operand.hbm [shape: bf16[16,128], index: 1, kind: input, shape index: {}]
  %s2 = inlined_call_operand.vmem [shape: f32[1,128], index: 2, kind: input, shape index: {}]
  %s3 = inlined_call_operand.hbm [shape: bf16[128,896], index: 3, kind: input, shape index: {}]
  %s4 = inlined_call_operand.vmem [shape: f32[1,896], index: 4, kind: input, shape index: {}]
  %s5 = inlined_call_operand.hbm [shape: bf16[16,896], index: 5, kind: output, shape index: {}]
  %s6 = sld [smem:[#allocation0]]
  $region42: #{tpu_custom_call.1} parent=0
    _
  %s8 = ssub.s32 1, %s6
  %s9 = scalar_select 0, %s8, %s6
  $region1: #{tpu_custom_call.1} parent=0
    #allocation2 [shape = 'u8[4096]{0}', space=vmem, size = 0x1000, scoped, tag = 'input window, operand 0, single buffered']
    #allocation3 [shape = 's32[1]{0}', space=sflag, size = 0x4, scoped, tag = 'scoped memory for tpu_custom_call.1']
    #allocation4 [shape = 's32[1]{0}', space=sflag, size = 0x4, scoped, tag = 'scoped memory for tpu_custom_call.1']
    #allocation5 [shape = 'u8[4096]{0}', space=vmem, size = 0x1000, scoped, tag = 'input window, operand 1, single buffered']
    #allocation6 [shape = 's32[1]{0}', space=sflag, size = 0x4, scoped, tag = 'scoped memory for tpu_custom_call.1']
    #allocation7 [shape = 'u8[229376]{0}', space=vmem, size = 0x38000, scoped, tag = 'input window, operand 3, single buffered']
    #allocation8 [shape = 'u8[28672]{0}', space=vmem, size = 0x7000, scoped, tag = 'output window, operand 0, single buffered']
    %10 = vsyncpa [#allocation3], 0
    %11 = vsyncpa [#allocation6], 0
    %12 = vsyncpa [#allocation4], 0
    // Predicated region
    $region2: #{tpu_custom_call.1} parent=1 // pred_check
      _
    $region3: #{tpu_custom_call.1} parent=1 // pred_check_branch
      %14 = sbr.rel (0) target = $region5
    $region4: #{tpu_custom_call.1} parent=1 // pred_region
      %s16 = ssub.s32 128, 128
      %17 = vsyncadd [#allocation3], %s16
      %s18 = sshll.u32 [#allocation2], 4
      %s19 = int_to_ptr.vmem [resolvable:$true] %s18
      %24 = dma.hbm_to_vmem [thread:$0]  %s0, 128, %s19, [#allocation3], 64, 64, 4
    $region5: #{tpu_custom_call.1} parent=1 // pred_fallthru
      _
    // Predicated region
    $region6: #{tpu_custom_call.1} parent=1 // pred_check
      _
    $region7: #{tpu_custom_call.1} parent=1 // pred_check_branch
      %26 = sbr.rel (0) target = $region9
    $region8: #{tpu_custom_call.1} parent=1 // pred_region
      %s28 = ssub.s32 128, 128
      %29 = vsyncadd [#allocation6], %s28
      %s30 = sshll.u32 [#allocation5], 4
      %s31 = int_to_ptr.vmem [resolvable:$true] %s30
      %36 = dma.hbm_to_vmem [thread:$0]  %s1, 128, %s31, [#allocation6], 64, 64, 4
    $region9: #{tpu_custom_call.1} parent=1 // pred_fallthru
      _
    // Predicated region
    $region10: #{tpu_custom_call.1} parent=1 // pred_check
      _
    $region11: #{tpu_custom_call.1} parent=1 // pred_check_branch
      %38 = sbr.rel (0) target = $region13
    $region12: #{tpu_custom_call.1} parent=1 // pred_region
      _
    $region13: #{tpu_custom_call.1} parent=1 // pred_fallthru
      _
    // Predicated region
    $region14: #{tpu_custom_call.1} parent=1 // pred_check
      _
    $region15: #{tpu_custom_call.1} parent=1 // pred_check_branch
      %40 = sbr.rel (0) target = $region17
    $region16: #{tpu_custom_call.1} parent=1 // pred_region
      %s42 = ssub.s32 7168, 7168
      %43 = vsyncadd [#allocation6], %s42
      %s44 = sshll.u32 [#allocation7], 4
      %s45 = int_to_ptr.vmem [resolvable:$true] %s44
      %50 = dma.hbm_to_vmem [thread:$0]  %s3, 7168, %s45, [#allocation6], 448, 448, 28
    $region17: #{tpu_custom_call.1} parent=1 // pred_fallthru
      _
    // Predicated region
    $region18: #{tpu_custom_call.1} parent=1 // pred_check
      _
    $region19: #{tpu_custom_call.1} parent=1 // pred_check_branch
      %52 = sbr.rel (0) target = $region21
    $region20: #{tpu_custom_call.1} parent=1 // pred_region
      _
    $region21: #{tpu_custom_call.1} parent=1 // pred_fallthru
      _
    // Predicated region
    $region22: #{tpu_custom_call.1} parent=1 // pred_check
      _
    $region23: #{tpu_custom_call.1} parent=1 // pred_check_branch
      %54 = sbr.rel (0) target = $region25
    $region24: #{tpu_custom_call.1} parent=1 // pred_region
      %55 = dma.done [#allocation3], 128
    $region25: #{tpu_custom_call.1} parent=1 // pred_fallthru
      _
    // Predicated region
    $region26: #{tpu_custom_call.1} parent=1 // pred_check
      _
    $region27: #{tpu_custom_call.1} parent=1 // pred_check_branch
      %57 = sbr.rel (0) target = $region29
    $region28: #{tpu_custom_call.1} parent=1 // pred_region
      %58 = dma.done [#allocation6], 128
    $region29: #{tpu_custom_call.1} parent=1 // pred_fallthru
      _
    // Predicated region
    $region30: #{tpu_custom_call.1} parent=1 // pred_check
      _
    $region31: #{tpu_custom_call.1} parent=1 // pred_check_branch
      %60 = sbr.rel (0) target = $region33
    $region32: #{tpu_custom_call.1} parent=1 // pred_region
      %61 = dma.done [#allocation6], 7168
    $region33: #{tpu_custom_call.1} parent=1 // pred_fallthru
      _
    %v63 = vld [vmem:[#allocation2] sm:$0xf]
    %v64 = vld [vmem:[#allocation2 + $0x4] sm:$0xf]
    %v65 = vld [vmem:[#allocation5] sm:$0xf]
    %v66 = vld [vmem:[#allocation5 + $0x4] sm:$0xf]
    %v67 = vld [vmem:[%s2] sm:$0x1]
    %v69 = vlaneseq
    %v70 = vshrl.u32 %v69, 7
    %v71 = vsub.s32 0, %v70
    %v72 = vrot.slane %v67, %v71
    %v76 = vunpack.c.l.b16 %v63
    %v77 = vunpack.c.l.b16 %v64
    %v78 = vpack.c.b16 %v77, %v76
    %v81 = vunpack.c.l.b16 %v65
    %v82 = vunpack.c.l.b16 %v66
    %v83 = vpack.c.b16 %v82, %v81
    %vm85 = vcmask 130048
    %v87 = vsel %vm85, %v78, 0
    %89 = vmatprep.subr.bf16.mxu0 0
    %90 = vmatpush1.bf16.msra.mxu0 %v83
    %91 = vmatprep.subr.bf16.mxu0 0
    %92 = vmatpush1.bf16.msra.mxu0 0
    %93 = vmatprep.subr.bf16.mxu0 0
    %94 = vmatpush1.bf16.msra.mxu0 0
    %95 = vmatprep.subr.bf16.mxu0 0
    %96 = vmatpush1.bf16.msra.mxu0 0
    %97 = vmatprep.subr.bf16.mxu0 0
    %98 = vmatpush1.bf16.msra.mxu0 0
    %99 = vmatprep.subr.bf16.mxu0 0
    %100 = vmatpush1.bf16.msra.mxu0 0
    %101 = vmatprep.subr.bf16.mxu0 0
    %102 = vmatpush1.bf16.msra.mxu0 0
    %103 = vmatprep.subr.bf16.mxu0 0
    %104 = vmatpush1.bf16.msra.mxu0 0
    %105 = vmatprep.subr.bf16.mxu0 0
    %106 = vmatpush1.bf16.msra.mxu0 0
    %107 = vmatprep.subr.bf16.mxu0 0
    %108 = vmatpush1.bf16.msra.mxu0 0
    %109 = vmatprep.subr.bf16.mxu0 0
    %110 = vmatpush1.bf16.msra.mxu0 0
    %111 = vmatprep.subr.bf16.mxu0 0
    %112 = vmatpush1.bf16.msra.mxu0 0
    %113 = vmatprep.subr.bf16.mxu0 0
    %114 = vmatpush1.bf16.msra.mxu0 0
    %115 = vmatprep.subr.bf16.mxu0 0
    %116 = vmatpush1.bf16.msra.mxu0 0
    %117 = vmatprep.subr.bf16.mxu0 0
    %118 = vmatpush1.bf16.msra.mxu0 0
    %119 = vmatprep.subr.bf16.mxu0 0
    %120 = vmatpush1.bf16.msra.mxu0 0
    %121 = vmatprep.mubr.bf16.mxu0 0
    %122 = vmatmul.mubr.bf16.gmra.mrb[0].mxu0 %v87
    %v123 = vpop.f32.mrb[0].mxu0
    %v124 = vadd.f32 %v72, %v123
    %v125 = vpop.f32.mrb[0].mxu0
    %v126 = vpop.f32.mrb[0].mxu0
    %v127 = vadd.f32 %v72, %v126
    %v128 = vpop.f32.mrb[0].mxu0
    %129 = vdwg.mxu0
    %v130 = vmax.f32 %v124, 0.0
    %v131 = vmax.f32 %v127, 0.0
    %v132 = vpack.c.bf16 %v131, %v130
    %v133 = vld [vmem:[#allocation7] sm:$0xff]
    %v134 = vld [vmem:[#allocation7 + $0x8] sm:$0xff]
    %v135 = vld [vmem:[#allocation7 + $0x10] sm:$0xff]
    %v136 = vld [vmem:[#allocation7 + $0x18] sm:$0xf]
    %v137 = vld [vmem:[#allocation7 + $0x1c] sm:$0xff]
    %v138 = vld [vmem:[#allocation7 + $0x24] sm:$0xff]
    %v139 = vld [vmem:[#allocation7 + $0x2c] sm:$0xff]
    %v140 = vld [vmem:[#allocation7 + $0x34] sm:$0xf]
    %v141 = vld [vmem:[#allocation7 + $0x38] sm:$0xff]
    %v142 = vld [vmem:[#allocation7 + $0x40] sm:$0xff]
    %v143 = vld [vmem:[#allocation7 + $0x48] sm:$0xff]
    %v144 = vld [vmem:[#allocation7 + $0x50] sm:$0xf]
    %v145 = vld [vmem:[#allocation7 + $0x54] sm:$0xff]
    %v146 = vld [vmem:[#allocation7 + $0x5c] sm:$0xff]
    %v147 = vld [vmem:[#allocation7 + $0x64] sm:$0xff]
    %v148 = vld [vmem:[#allocation7 + $0x6c] sm:$0xf]
    %v149 = vld [vmem:[#allocation7 + $0x70] sm:$0xff]
    %v150 = vld [vmem:[#allocation7 + $0x78] sm:$0xff]
    %v151 = vld [vmem:[#allocation7 + $0x80] sm:$0xff]
    %v152 = vld [vmem:[#allocation7 + $0x88] sm:$0xf]
    %v153 = vld [vmem:[#allocation7 + $0x8c] sm:$0xff]
    %v154 = vld [vmem:[#allocation7 + $0x94] sm:$0xff]
    %v155 = vld [vmem:[#allocation7 + $0x9c] sm:$0xff]
    %v156 = vld [vmem:[#allocation7 + $0xa4] sm:$0xf]
    %v157 = vld [vmem:[#allocation7 + $0xa8] sm:$0xff]
    %v158 = vld [vmem:[#allocation7 + $0xb0] sm:$0xff]
    %v159 = vld [vmem:[#allocation7 + $0xb8] sm:$0xff]
    %v160 = vld [vmem:[#allocation7 + $0xc0] sm:$0xf]
    %v161 = vld [vmem:[#allocation7 + $0xc4] sm:$0xff]
    %v162 = vld [vmem:[#allocation7 + $0xcc] sm:$0xff]
    %v163 = vld [vmem:[#allocation7 + $0xd4] sm:$0xff]
    %v164 = vld [vmem:[#allocation7 + $0xdc] sm:$0xf]
    %v165 = vld [vmem:[#allocation7 + $0xe0] sm:$0xff]
    %v166 = vld [vmem:[#allocation7 + $0xe8] sm:$0xff]
    %v167 = vld [vmem:[#allocation7 + $0xf0] sm:$0xff]
    %v168 = vld [vmem:[#allocation7 + $0xf8] sm:$0xf]
    %v169 = vld [vmem:[#allocation7 + $0xfc] sm:$0xff]
    %v170 = vld [vmem:[#allocation7 + $0x104] sm:$0xff]
    %v171 = vld [vmem:[#allocation7 + $0x10c] sm:$0xff]
    %v172 = vld [vmem:[#allocation7 + $0x114] sm:$0xf]
    %v173 = vld [vmem:[#allocation7 + $0x118] sm:$0xff]
    %v174 = vld [vmem:[#allocation7 + $0x120] sm:$0xff]
    %v175 = vld [vmem:[#allocation7 + $0x128] sm:$0xff]
    %v176 = vld [vmem:[#allocation7 + $0x130] sm:$0xf]
    %v177 = vld [vmem:[#allocation7 + $0x134] sm:$0xff]
    %v178 = vld [vmem:[#allocation7 + $0x13c] sm:$0xff]
    %v179 = vld [vmem:[#allocation7 + $0x144] sm:$0xff]
    %v180 = vld [vmem:[#allocation7 + $0x14c] sm:$0xf]
    %v181 = vld [vmem:[#allocation7 + $0x150] sm:$0xff]
    %v182 = vld [vmem:[#allocation7 + $0x158] sm:$0xff]
    %v183 = vld [vmem:[#allocation7 + $0x160] sm:$0xff]
    %v184 = vld [vmem:[#allocation7 + $0x168] sm:$0xf]
    %v185 = vld [vmem:[#allocation7 + $0x16c] sm:$0xff]
    %v186 = vld [vmem:[#allocation7 + $0x174] sm:$0xff]
    %v187 = vld [vmem:[#allocation7 + $0x17c] sm:$0xff]
    %v188 = vld [vmem:[#allocation7 + $0x184] sm:$0xf]
    %v189 = vld [vmem:[#allocation7 + $0x188] sm:$0xff]
    %v190 = vld [vmem:[#allocation7 + $0x190] sm:$0xff]
    %v191 = vld [vmem:[#allocation7 + $0x198] sm:$0xff]
    %v192 = vld [vmem:[#allocation7 + $0x1a0] sm:$0xf]
    %v193 = vld [vmem:[#allocation7 + $0x1a4] sm:$0xff]
    %v194 = vld [vmem:[#allocation7 + $0x1ac] sm:$0xff]
    %v195 = vld [vmem:[#allocation7 + $0x1b4] sm:$0xff]
    %v196 = vld [vmem:[#allocation7 + $0x1bc] sm:$0xf]
    %v197 = vld [vmem:[%s4] sm:$0xff]
    %v199 = vlaneseq
    %v200 = vshrl.u32 %v199, 7
    %v201 = vsub.s32 0, %v200
    %v202 = vrot.slane %v197, %v201
    %v203 = vlaneseq
    %v204 = vshrl.u32 %v203, 7
    %v205 = vsub.s32 1, %v204
    %v206 = vrot.slane %v197, %v205
    %v207 = vlaneseq
    %v208 = vshrl.u32 %v207, 7
    %v209 = vsub.s32 2, %v208
    %v210 = vrot.slane %v197, %v209
    %v211 = vlaneseq
    %v212 = vshrl.u32 %v211, 7
    %v213 = vsub.s32 3, %v212
    %v214 = vrot.slane %v197, %v213
    %v215 = vlaneseq
    %v216 = vshrl.u32 %v215, 7
    %v217 = vsub.s32 4, %v216
    %v218 = vrot.slane %v197, %v217
    %v219 = vlaneseq
    %v220 = vshrl.u32 %v219, 7
    %v221 = vsub.s32 5, %v220
    %v222 = vrot.slane %v197, %v221
    %v223 = vlaneseq
    %v224 = vshrl.u32 %v223, 7
    %v225 = vsub.s32 6, %v224
    %v226 = vrot.slane %v197, %v225
    %v298 = vunpack.c.l.b16 %v133
    %v299 = vunpack.c.h.b16 %v133
    %v300 = vunpack.c.l.b16 %v134
    %v301 = vunpack.c.h.b16 %v134
    %v302 = vunpack.c.l.b16 %v135
    %v303 = vunpack.c.h.b16 %v135
    %v304 = vunpack.c.l.b16 %v136
    %v305 = vunpack.c.l.b16 %v137
    %v306 = vunpack.c.h.b16 %v137
    %v307 = vunpack.c.l.b16 %v138
    %v308 = vunpack.c.h.b16 %v138
    %v309 = vunpack.c.l.b16 %v139
    %v310 = vunpack.c.h.b16 %v139
    %v311 = vunpack.c.l.b16 %v140
    %v312 = vunpack.c.l.b16 %v141
    %v313 = vunpack.c.h.b16 %v141
    %v314 = vunpack.c.l.b16 %v142
    %v315 = vunpack.c.h.b16 %v142
    %v316 = vunpack.c.l.b16 %v143
    %v317 = vunpack.c.h.b16 %v143
    %v318 = vunpack.c.l.b16 %v144
    %v319 = vunpack.c.l.b16 %v145
    %v320 = vunpack.c.h.b16 %v145
    %v321 = vunpack.c.l.b16 %v146
    %v322 = vunpack.c.h.b16 %v146
    %v323 = vunpack.c.l.b16 %v147
    %v324 = vunpack.c.h.b16 %v147
    %v325 = vunpack.c.l.b16 %v148
    %v326 = vunpack.c.l.b16 %v149
    %v327 = vunpack.c.h.b16 %v149
    %v328 = vunpack.c.l.b16 %v150
    %v329 = vunpack.c.h.b16 %v150
    %v330 = vunpack.c.l.b16 %v151
    %v331 = vunpack.c.h.b16 %v151
    %v332 = vunpack.c.l.b16 %v152
    %v333 = vunpack.c.l.b16 %v153
    %v334 = vunpack.c.h.b16 %v153
    %v335 = vunpack.c.l.b16 %v154
    %v336 = vunpack.c.h.b16 %v154
    %v337 = vunpack.c.l.b16 %v155
    %v338 = vunpack.c.h.b16 %v155
    %v339 = vunpack.c.l.b16 %v156
    %v340 = vunpack.c.l.b16 %v157
    %v341 = vunpack.c.h.b16 %v157
    %v342 = vunpack.c.l.b16 %v158
    %v343 = vunpack.c.h.b16 %v158
    %v344 = vunpack.c.l.b16 %v159
    %v345 = vunpack.c.h.b16 %v159
    %v346 = vunpack.c.l.b16 %v160
    %v347 = vunpack.c.l.b16 %v161
    %v348 = vunpack.c.h.b16 %v161
    %v349 = vunpack.c.l.b16 %v162
    %v350 = vunpack.c.h.b16 %v162
    %v351 = vunpack.c.l.b16 %v163
    %v352 = vunpack.c.h.b16 %v163
    %v353 = vunpack.c.l.b16 %v164
    %v354 = vunpack.c.l.b16 %v165
    %v355 = vunpack.c.h.b16 %v165
    %v356 = vunpack.c.l.b16 %v166
    %v357 = vunpack.c.h.b16 %v166
    %v358 = vunpack.c.l.b16 %v167
    %v359 = vunpack.c.h.b16 %v167
    %v360 = vunpack.c.l.b16 %v168
    %v361 = vunpack.c.l.b16 %v169
    %v362 = vunpack.c.h.b16 %v169
    %v363 = vunpack.c.l.b16 %v170
    %v364 = vunpack.c.h.b16 %v170
    %v365 = vunpack.c.l.b16 %v171
    %v366 = vunpack.c.h.b16 %v171
    %v367 = vunpack.c.l.b16 %v172
    %v368 = vunpack.c.l.b16 %v173
    %v369 = vunpack.c.h.b16 %v173
    %v370 = vunpack.c.l.b16 %v174
    %v371 = vunpack.c.h.b16 %v174
    %v372 = vunpack.c.l.b16 %v175
    %v373 = vunpack.c.h.b16 %v175
    %v374 = vunpack.c.l.b16 %v176
    %v375 = vunpack.c.l.b16 %v177
    %v376 = vunpack.c.h.b16 %v177
    %v377 = vunpack.c.l.b16 %v178
    %v378 = vunpack.c.h.b16 %v178
    %v379 = vunpack.c.l.b16 %v179
    %v380 = vunpack.c.h.b16 %v179
    %v381 = vunpack.c.l.b16 %v180
    %v382 = vunpack.c.l.b16 %v181
    %v383 = vunpack.c.h.b16 %v181
    %v384 = vunpack.c.l.b16 %v182
    %v385 = vunpack.c.h.b16 %v182
    %v386 = vunpack.c.l.b16 %v183
    %v387 = vunpack.c.h.b16 %v183
    %v388 = vunpack.c.l.b16 %v184
    %v389 = vunpack.c.l.b16 %v185
    %v390 = vunpack.c.h.b16 %v185
    %v391 = vunpack.c.l.b16 %v186
    %v392 = vunpack.c.h.b16 %v186
    %v393 = vunpack.c.l.b16 %v187
    %v394 = vunpack.c.h.b16 %v187
    %v395 = vunpack.c.l.b16 %v188
    %v396 = vunpack.c.l.b16 %v189
    %v397 = vunpack.c.h.b16 %v189
    %v398 = vunpack.c.l.b16 %v190
    %v399 = vunpack.c.h.b16 %v190
    %v400 = vunpack.c.l.b16 %v191
    %v401 = vunpack.c.h.b16 %v191
    %v402 = vunpack.c.l.b16 %v192
    %v403 = vunpack.c.l.b16 %v193
    %v404 = vunpack.c.h.b16 %v193
    %v405 = vunpack.c.l.b16 %v194
    %v406 = vunpack.c.h.b16 %v194
    %v407 = vunpack.c.l.b16 %v195
    %v408 = vunpack.c.h.b16 %v195
    %v409 = vunpack.c.l.b16 %v196
    %v410 = vpack.c.b16 %v305, %v298
    %v411 = vpack.c.b16 %v306, %v299
    %v412 = vpack.c.b16 %v307, %v300
    %v413 = vpack.c.b16 %v308, %v301
    %v414 = vpack.c.b16 %v309, %v302
    %v415 = vpack.c.b16 %v310, %v303
    %v416 = vpack.c.b16 %v311, %v304
    %v417 = vpack.c.b16 %v319, %v312
    %v418 = vpack.c.b16 %v320, %v313
    %v419 = vpack.c.b16 %v321, %v314
    %v420 = vpack.c.b16 %v322, %v315
    %v421 = vpack.c.b16 %v323, %v316
    %v422 = vpack.c.b16 %v324, %v317
    %v423 = vpack.c.b16 %v325, %v318
    %v424 = vpack.c.b16 %v333, %v326
    %v425 = vpack.c.b16 %v334, %v327
    %v426 = vpack.c.b16 %v335, %v328
    %v427 = vpack.c.b16 %v336, %v329
    %v428 = vpack.c.b16 %v337, %v330
    %v429 = vpack.c.b16 %v338, %v331
    %v430 = vpack.c.b16 %v339, %v332
    %v431 = vpack.c.b16 %v347, %v340
    %v432 = vpack.c.b16 %v348, %v341
    %v433 = vpack.c.b16 %v349, %v342
    %v434 = vpack.c.b16 %v350, %v343
    %v435 = vpack.c.b16 %v351, %v344
    %v436 = vpack.c.b16 %v352, %v345
    %v437 = vpack.c.b16 %v353, %v346
    %v438 = vpack.c.b16 %v361, %v354
    %v439 = vpack.c.b16 %v362, %v355
    %v440 = vpack.c.b16 %v363, %v356
    %v441 = vpack.c.b16 %v364, %v357
    %v442 = vpack.c.b16 %v365, %v358
    %v443 = vpack.c.b16 %v366, %v359
    %v444 = vpack.c.b16 %v367, %v360
    %v445 = vpack.c.b16 %v375, %v368
    %v446 = vpack.c.b16 %v376, %v369
    %v447 = vpack.c.b16 %v377, %v370
    %v448 = vpack.c.b16 %v378, %v371
    %v449 = vpack.c.b16 %v379, %v372
    %v450 = vpack.c.b16 %v380, %v373
    %v451 = vpack.c.b16 %v381, %v374
    %v452 = vpack.c.b16 %v389, %v382
    %v453 = vpack.c.b16 %v390, %v383
    %v454 = vpack.c.b16 %v391, %v384
    %v455 = vpack.c.b16 %v392, %v385
    %v456 = vpack.c.b16 %v393, %v386
    %v457 = vpack.c.b16 %v394, %v387
    %v458 = vpack.c.b16 %v395, %v388
    %v459 = vpack.c.b16 %v403, %v396
    %v460 = vpack.c.b16 %v404, %v397
    %v461 = vpack.c.b16 %v405, %v398
    %v462 = vpack.c.b16 %v406, %v399
    %v463 = vpack.c.b16 %v407, %v400
    %v464 = vpack.c.b16 %v408, %v401
    %v465 = vpack.c.b16 %v409, %v402
    %522 = vmatprep.subr.bf16.mxu0 %v411
    %523 = vmatpush1.bf16.msra.mxu0 %v410
    %524 = vmatprep.subr.bf16.mxu0 %v418
    %525 = vmatpush1.bf16.msra.mxu0 %v417
    %526 = vmatprep.subr.bf16.mxu0 %v425
    %527 = vmatpush1.bf16.msra.mxu0 %v424
    %528 = vmatprep.subr.bf16.mxu0 %v432
    %529 = vmatpush1.bf16.msra.mxu0 %v431
    %530 = vmatprep.subr.bf16.mxu0 %v439
    %531 = vmatpush1.bf16.msra.mxu0 %v438
    %532 = vmatprep.subr.bf16.mxu0 %v446
    %533 = vmatpush1.bf16.msra.mxu0 %v445
    %534 = vmatprep.subr.bf16.mxu0 %v453
    %535 = vmatpush1.bf16.msra.mxu0 %v452
    %536 = vmatprep.subr.bf16.mxu0 %v460
    %537 = vmatpush1.bf16.msra.mxu0 %v459
    %538 = vmatprep.subr.bf16.mxu0 0
    %539 = vmatpush1.bf16.msra.mxu0 0
    %540 = vmatprep.subr.bf16.mxu0 0
    %541 = vmatpush1.bf16.msra.mxu0 0
    %542 = vmatprep.subr.bf16.mxu0 0
    %543 = vmatpush1.bf16.msra.mxu0 0
    %544 = vmatprep.subr.bf16.mxu0 0
    %545 = vmatpush1.bf16.msra.mxu0 0
    %546 = vmatprep.subr.bf16.mxu0 0
    %547 = vmatpush1.bf16.msra.mxu0 0
    %548 = vmatprep.subr.bf16.mxu0 0
    %549 = vmatpush1.bf16.msra.mxu0 0
    %550 = vmatprep.subr.bf16.mxu0 0
    %551 = vmatpush1.bf16.msra.mxu0 0
    %552 = vmatprep.subr.bf16.mxu0 0
    %553 = vmatpush1.bf16.msra.mxu0 0
    %554 = vmatprep.mubr.bf16.mxu0 0
    %555 = vmatmul.mubr.bf16.gmra.mrb[0].mxu0 %v132
    %v556 = vpop.f32.mrb[0].mxu0
    %v557 = vadd.f32 %v202, %v556
    %v558 = vpop.f32.mrb[0].mxu0
    %v559 = vadd.f32 %v206, %v558
    %v560 = vpop.f32.mrb[0].mxu0
    %v561 = vadd.f32 %v202, %v560
    %v562 = vpop.f32.mrb[0].mxu0
    %v563 = vadd.f32 %v206, %v562
    %564 = vdwg.mxu0
    %565 = vmatprep.subr.bf16.mxu0 %v413
    %566 = vmatpush1.bf16.msra.mxu0 %v412
    %567 = vmatprep.subr.bf16.mxu0 %v420
    %568 = vmatpush1.bf16.msra.mxu0 %v419
    %569 = vmatprep.subr.bf16.mxu0 %v427
    %570 = vmatpush1.bf16.msra.mxu0 %v426
    %571 = vmatprep.subr.bf16.mxu0 %v434
    %572 = vmatpush1.bf16.msra.mxu0 %v433
    %573 = vmatprep.subr.bf16.mxu0 %v441
    %574 = vmatpush1.bf16.msra.mxu0 %v440
    %575 = vmatprep.subr.bf16.mxu0 %v448
    %576 = vmatpush1.bf16.msra.mxu0 %v447
    %577 = vmatprep.subr.bf16.mxu0 %v455
    %578 = vmatpush1.bf16.msra.mxu0 %v454
    %579 = vmatprep.subr.bf16.mxu0 %v462
    %580 = vmatpush1.bf16.msra.mxu0 %v461
    %581 = vmatprep.subr.bf16.mxu0 0
    %582 = vmatpush1.bf16.msra.mxu0 0
    %583 = vmatprep.subr.bf16.mxu0 0
    %584 = vmatpush1.bf16.msra.mxu0 0
    %585 = vmatprep.subr.bf16.mxu0 0
    %586 = vmatpush1.bf16.msra.mxu0 0
    %587 = vmatprep.subr.bf16.mxu0 0
    %588 = vmatpush1.bf16.msra.mxu0 0
    %589 = vmatprep.subr.bf16.mxu0 0
    %590 = vmatpush1.bf16.msra.mxu0 0
    %591 = vmatprep.subr.bf16.mxu0 0
    %592 = vmatpush1.bf16.msra.mxu0 0
    %593 = vmatprep.subr.bf16.mxu0 0
    %594 = vmatpush1.bf16.msra.mxu0 0
    %595 = vmatprep.subr.bf16.mxu0 0
    %596 = vmatpush1.bf16.msra.mxu0 0
    %597 = vmatprep.mubr.bf16.mxu0 0
    %598 = vmatmul.mubr.bf16.gmra.mrb[0].mxu0 %v132
    %v599 = vpop.f32.mrb[0].mxu0
    %v600 = vadd.f32 %v210, %v599
    %v601 = vpop.f32.mrb[0].mxu0
    %v602 = vadd.f32 %v214, %v601
    %v603 = vpop.f32.mrb[0].mxu0
    %v604 = vadd.f32 %v210, %v603
    %v605 = vpop.f32.mrb[0].mxu0
    %v606 = vadd.f32 %v214, %v605
    %607 = vdwg.mxu0
    %608 = vmatprep.subr.bf16.mxu0 %v415
    %609 = vmatpush1.bf16.msra.mxu0 %v414
    %610 = vmatprep.subr.bf16.mxu0 %v422
    %611 = vmatpush1.bf16.msra.mxu0 %v421
    %612 = vmatprep.subr.bf16.mxu0 %v429
    %613 = vmatpush1.bf16.msra.mxu0 %v428
    %614 = vmatprep.subr.bf16.mxu0 %v436
    %615 = vmatpush1.bf16.msra.mxu0 %v435
    %616 = vmatprep.subr.bf16.mxu0 %v443
    %617 = vmatpush1.bf16.msra.mxu0 %v442
    %618 = vmatprep.subr.bf16.mxu0 %v450
    %619 = vmatpush1.bf16.msra.mxu0 %v449
    %620 = vmatprep.subr.bf16.mxu0 %v457
    %621 = vmatpush1.bf16.msra.mxu0 %v456
    %622 = vmatprep.subr.bf16.mxu0 %v464
    %623 = vmatpush1.bf16.msra.mxu0 %v463
    %624 = vmatprep.subr.bf16.mxu0 0
    %625 = vmatpush1.bf16.msra.mxu0 0
    %626 = vmatprep.subr.bf16.mxu0 0
    %627 = vmatpush1.bf16.msra.mxu0 0
    %628 = vmatprep.subr.bf16.mxu0 0
    %629 = vmatpush1.bf16.msra.mxu0 0
    %630 = vmatprep.subr.bf16.mxu0 0
    %631 = vmatpush1.bf16.msra.mxu0 0
    %632 = vmatprep.subr.bf16.mxu0 0
    %633 = vmatpush1.bf16.msra.mxu0 0
    %634 = vmatprep.subr.bf16.mxu0 0
    %635 = vmatpush1.bf16.msra.mxu0 0
    %636 = vmatprep.subr.bf16.mxu0 0
    %637 = vmatpush1.bf16.msra.mxu0 0
    %638 = vmatprep.subr.bf16.mxu0 0
    %639 = vmatpush1.bf16.msra.mxu0 0
    %640 = vmatprep.mubr.bf16.mxu0 0
    %641 = vmatmul.mubr.bf16.gmra.mrb[0].mxu0 %v132
    %v642 = vpop.f32.mrb[0].mxu0
    %v643 = vadd.f32 %v218, %v642
    %v644 = vpop.f32.mrb[0].mxu0
    %v645 = vadd.f32 %v222, %v644
    %v646 = vpop.f32.mrb[0].mxu0
    %v647 = vadd.f32 %v218, %v646
    %v648 = vpop.f32.mrb[0].mxu0
    %v649 = vadd.f32 %v222, %v648
    %650 = vdwg.mxu0
    %651 = vmatprep.subr.bf16.mxu0 0
    %652 = vmatpush1.bf16.msra.mxu0 %v416
    %653 = vmatprep.subr.bf16.mxu0 0
    %654 = vmatpush1.bf16.msra.mxu0 %v423
    %655 = vmatprep.subr.bf16.mxu0 0
    %656 = vmatpush1.bf16.msra.mxu0 %v430
    %657 = vmatprep.subr.bf16.mxu0 0
    %658 = vmatpush1.bf16.msra.mxu0 %v437
    %659 = vmatprep.subr.bf16.mxu0 0
    %660 = vmatpush1.bf16.msra.mxu0 %v444
    %661 = vmatprep.subr.bf16.mxu0 0
    %662 = vmatpush1.bf16.msra.mxu0 %v451
    %663 = vmatprep.subr.bf16.mxu0 0
    %664 = vmatpush1.bf16.msra.mxu0 %v458
    %665 = vmatprep.subr.bf16.mxu0 0
    %666 = vmatpush1.bf16.msra.mxu0 %v465
    %667 = vmatprep.subr.bf16.mxu0 0
    %668 = vmatpush1.bf16.msra.mxu0 0
    %669 = vmatprep.subr.bf16.mxu0 0
    %670 = vmatpush1.bf16.msra.mxu0 0
    %671 = vmatprep.subr.bf16.mxu0 0
    %672 = vmatpush1.bf16.msra.mxu0 0
    %673 = vmatprep.subr.bf16.mxu0 0
    %674 = vmatpush1.bf16.msra.mxu0 0
    %675 = vmatprep.subr.bf16.mxu0 0
    %676 = vmatpush1.bf16.msra.mxu0 0
    %677 = vmatprep.subr.bf16.mxu0 0
    %678 = vmatpush1.bf16.msra.mxu0 0
    %679 = vmatprep.subr.bf16.mxu0 0
    %680 = vmatpush1.bf16.msra.mxu0 0
    %681 = vmatprep.subr.bf16.mxu0 0
    %682 = vmatpush1.bf16.msra.mxu0 0
    %683 = vmatprep.mubr.bf16.mxu0 0
    %684 = vmatmul.mubr.bf16.gmra.mrb[0].mxu0 %v132
    %v685 = vpop.f32.mrb[0].mxu0
    %v686 = vadd.f32 %v226, %v685
    %v687 = vpop.f32.mrb[0].mxu0
    %v688 = vpop.f32.mrb[0].mxu0
    %v689 = vadd.f32 %v226, %v688
    %v690 = vpop.f32.mrb[0].mxu0
    %691 = vdwg.mxu0
    %v692 = vmul.f32 %v557, 0.5
    %v693 = vmul.f32 %v559, 0.5
    %v694 = vmul.f32 %v600, 0.5
    %v695 = vmul.f32 %v602, 0.5
    %v696 = vmul.f32 %v643, 0.5
    %v697 = vmul.f32 %v645, 0.5
    %v698 = vmul.f32 %v686, 0.5
    %v699 = vmul.f32 %v561, 0.5
    %v700 = vmul.f32 %v563, 0.5
    %v701 = vmul.f32 %v604, 0.5
    %v702 = vmul.f32 %v606, 0.5
    %v703 = vmul.f32 %v647, 0.5
    %v704 = vmul.f32 %v649, 0.5
    %v705 = vmul.f32 %v689, 0.5
    %v706 = vtanh.pop %v692
    %v707 = vtanh.pop %v693
    %v708 = vtanh.pop %v694
    %v709 = vtanh.pop %v695
    %v710 = vtanh.pop %v696
    %v711 = vtanh.pop %v697
    %v712 = vtanh.pop %v698
    %v713 = vtanh.pop %v699
    %v714 = vtanh.pop %v700
    %v715 = vtanh.pop %v701
    %v716 = vtanh.pop %v702
    %v717 = vtanh.pop %v703
    %v718 = vtanh.pop %v704
    %v719 = vtanh.pop %v705
    %v720 = vmul.f32 %v706, 0.5
    %v721 = vmul.f32 %v707, 0.5
    %v722 = vmul.f32 %v708, 0.5
    %v723 = vmul.f32 %v709, 0.5
    %v724 = vmul.f32 %v710, 0.5
    %v725 = vmul.f32 %v711, 0.5
    %v726 = vmul.f32 %v712, 0.5
    %v727 = vmul.f32 %v713, 0.5
    %v728 = vmul.f32 %v714, 0.5
    %v729 = vmul.f32 %v715, 0.5
    %v730 = vmul.f32 %v716, 0.5
    %v731 = vmul.f32 %v717, 0.5
    %v732 = vmul.f32 %v718, 0.5
    %v733 = vmul.f32 %v719, 0.5
    %v734 = vadd.f32 %v720, 0.5
    %v735 = vadd.f32 %v721, 0.5
    %v736 = vadd.f32 %v722, 0.5
    %v737 = vadd.f32 %v723, 0.5
    %v738 = vadd.f32 %v724, 0.5
    %v739 = vadd.f32 %v725, 0.5
    %v740 = vadd.f32 %v726, 0.5
    %v741 = vadd.f32 %v727, 0.5
    %v742 = vadd.f32 %v728, 0.5
    %v743 = vadd.f32 %v729, 0.5
    %v744 = vadd.f32 %v730, 0.5
    %v745 = vadd.f32 %v731, 0.5
    %v746 = vadd.f32 %v732, 0.5
    %v747 = vadd.f32 %v733, 0.5
    %v748 = vpack.c.bf16 %v741, %v734
    %v749 = vpack.c.bf16 %v742, %v735
    %v750 = vpack.c.bf16 %v743, %v736
    %v751 = vpack.c.bf16 %v744, %v737
    %v752 = vpack.c.bf16 %v745, %v738
    %v753 = vpack.c.bf16 %v746, %v739
    %v754 = vpack.c.bf16 %v747, %v740
    %v762 = vunpack.c.l.b16 %v748
    %v763 = vunpack.c.l.b16 %v749
    %v764 = vunpack.c.l.b16 %v750
    %v765 = vunpack.c.l.b16 %v751
    %v766 = vunpack.c.l.b16 %v752
    %v767 = vunpack.c.l.b16 %v753
    %v768 = vunpack.c.l.b16 %v754
    %v769 = vunpack.c.h.b16 %v748
    %v770 = vunpack.c.h.b16 %v749
    %v771 = vunpack.c.h.b16 %v750
    %v772 = vunpack.c.h.b16 %v751
    %v773 = vunpack.c.h.b16 %v752
    %v774 = vunpack.c.h.b16 %v753
    %v775 = vunpack.c.h.b16 %v754
    %v776 = vpack.c.b16 %v763, %v762
    %v777 = vpack.c.b16 %v765, %v764
    %v778 = vpack.c.b16 %v767, %v766
    %v779 = vpack.c.b16 %v768, %v768
    %v780 = vpack.c.b16 %v770, %v769
    %v781 = vpack.c.b16 %v772, %v771
    %v782 = vpack.c.b16 %v774, %v773
    %v783 = vpack.c.b16 %v775, %v775
    %792 = vst [vmem:[#allocation8] sm:$0xff] %v776
    %793 = vst [vmem:[#allocation8 + $0x8] sm:$0xff] %v777
    %794 = vst [vmem:[#allocation8 + $0x10] sm:$0xff] %v778
    %795 = vst [vmem:[#allocation8 + $0x18] sm:$0xf] %v779
    %796 = vst [vmem:[#allocation8 + $0x1c] sm:$0xff] %v780
    %797 = vst [vmem:[#allocation8 + $0x24] sm:$0xff] %v781
    %798 = vst [vmem:[#allocation8 + $0x2c] sm:$0xff] %v782
    %799 = vst [vmem:[#allocation8 + $0x34] sm:$0xf] %v783
    // Predicated region
    $region34: #{tpu_custom_call.1} parent=1 // pred_check
      _
    $region35: #{tpu_custom_call.1} parent=1 // pred_check_branch
      %801 = sbr.rel (0) target = $region37
    $region36: #{tpu_custom_call.1} parent=1 // pred_region
      %s803 = ssub.s32 896, 896
      %804 = vsyncadd [#allocation4], %s803
      %s805 = sshll.u32 [#allocation8], 4
      %s806 = int_to_ptr.vmem [resolvable:$true] %s805
      %811 = dma.vmem_to_hbm [thread:$0]  %s806, 896, %s5, [#allocation4], 448, 448, 28
    $region37: #{tpu_custom_call.1} parent=1 // pred_fallthru
      _
    // Predicated region
    $region38: #{tpu_custom_call.1} parent=1 // pred_check
      _
    $region39: #{tpu_custom_call.1} parent=1 // pred_check_branch
      %813 = sbr.rel (0) target = $region41
    $region40: #{tpu_custom_call.1} parent=1 // pred_region
      %814 = dma.done [#allocation4], 896
    $region41: #{tpu_custom_call.1} parent=1 // pred_fallthru
      _
    %815 = vsyncpa [#allocation3], 1
    %816 = vsyncpa [#allocation6], 1
    %817 = vsyncpa [#allocation4], 1

</llo_original>
